<compile_context>
chip_gen: v5e
topology: v5e:2x2
jax: 0.10.0
libtpu: 0.0.40
codegen_flags: <defaults>
</compile_context>

<pallas_src>
import numpy as np
import jax
import jax.numpy as jnp
from jax.experimental import pallas as pl
from jax.experimental.pallas import tpu as pltpu

LANE = 128      # vreg lane width
SUBLANE = 8     # f32 sublane count


def _round_up(n, m):
    return ((n + m - 1) // m) * m


def _vmem_limit_bytes():
    """Generation-aware VMEM budget: ~7/8 of physical capacity."""
    try:
        cap = int(pltpu.get_tpu_info().vmem_capacity_bytes)
    except Exception:
        cap = 64 * 1024 * 1024  # conservative fallback (v7x-sized)
    return max(16 * 1024 * 1024, (cap * 7) // 8)


# ----------------------------------------------------------------------------
# Mask construction (replicates MADE._create_masks with numpy, fixed seed).
# ----------------------------------------------------------------------------
def create_made_masks(d_in, hidden_dims, gaussian=False, random_order=False, seed=0):
    np.random.seed(seed)
    L = len(hidden_dims)
    D = d_in
    masks = {}
    masks[0] = np.random.permutation(D) if random_order else np.arange(D)
    for l in range(L):
        low = int(masks[l].min())
        masks[l + 1] = np.random.randint(low=low, high=D - 1, size=hidden_dims[l])
    masks[L + 1] = masks[0]

    mask_matrix = []
    for i in range(len(masks) - 1):
        m = masks[i]
        m_next = masks[i + 1]
        # Reference uses >= for every layer (including the last); replicated.
        M = (m_next[:, None] >= m[None, :]).astype(np.float32)  # (d_out_l, d_in_l)
        mask_matrix.append(M)

    if gaussian:
        m = mask_matrix.pop(-1)
        mask_matrix.append(np.concatenate((m, m), axis=0))
    return mask_matrix  # same layout as torch weight: (d_out_l, d_in_l)


# ----------------------------------------------------------------------------
# Deterministic parameter init (mimics nn.Linear default: U(-1/sqrt(fan_in), +)).
# ----------------------------------------------------------------------------
def init_params(key, d_in, hidden_dims, d_out):
    dims = [d_in, *hidden_dims, d_out]
    weights, biases = [], []
    for i in range(len(dims) - 1):
        fan_in, fan_out = dims[i], dims[i + 1]
        key, kw, kb = jax.random.split(key, 3)
        bound = 1.0 / np.sqrt(fan_in)
        w = jax.random.uniform(kw, (fan_out, fan_in), jnp.float32, -bound, bound)
        b = jax.random.uniform(kb, (fan_out,), jnp.float32, -bound, bound)
        weights.append(w)
        biases.append(b)
    return weights, biases


# ----------------------------------------------------------------------------
# One-time host-side prepacking:
#   - fuse mask into weight (in f32 so mask zeros stay exact), transpose to
#     (d_in_l, d_out_l),
#   - zero-pad ONLY the hidden widths to a multiple of 128 lanes (the true
#     d_in / d_out stay unpadded so the activation I/O path carries no pad),
#   - biases stay f32; weights stored in weight_dtype (default bf16).
# ----------------------------------------------------------------------------
def prepack_made_params(weights, masks, biases, weight_dtype=jnp.bfloat16):
    d_in = weights[0].shape[1]
    dims = [d_in] + [w.shape[0] for w in weights]             # true layer widths
    dims_pad = [dims[0]] + [_round_up(d, LANE) for d in dims[1:-1]] + [dims[-1]]

    packed = []
    for i, (w, m, b) in enumerate(zip(weights, masks, biases)):
        wm = (jnp.asarray(m, jnp.float32) * jnp.asarray(w, jnp.float32)).T  # (d_in_l, d_out_l)
        din_p, dout_p = dims_pad[i], dims_pad[i + 1]
        wm_p = jnp.zeros((din_p, dout_p), jnp.float32)
        wm_p = wm_p.at[: wm.shape[0], : wm.shape[1]].set(wm)
        b_p = jnp.zeros((1, dout_p), jnp.float32)
        b_p = b_p.at[0, : b.shape[0]].set(jnp.asarray(b, jnp.float32))
        packed.append(wm_p.astype(weight_dtype))  # fused weight (d_in_l, d_out_l)
        packed.append(b_p)                        # f32 bias (1, d_out_l)
    return packed


# ----------------------------------------------------------------------------
# Pallas kernel: whole masked MLP on one batch tile.
# refs: x_tile, then (fused_weight, bias) per layer, then out_tile.
# TODO(synk): only the default activation='relu' is implemented
#             (get_activation_class dispatch not ported).
# ----------------------------------------------------------------------------
def make_made_kernel(n_layers, gaussian):
    def kernel(*refs):
        x_ref = refs[0]
        out_ref = refs[-1]
        params = refs[1:-1]
        h = x_ref[...]                                   # f32 (TB, d_in)
        for i in range(n_layers):
            wm = params[2 * i][...]                      # (d_in_l, d_out_l), bf16/f32
            b = params[2 * i + 1][...]                   # (1, d_out_l), f32
            lhs = h.astype(wm.dtype)
            h = jnp.dot(lhs, wm, preferred_element_type=jnp.float32) + b
            if i < n_layers - 1:
                h = jnp.maximum(h, 0.0)                  # ReLU (f32, VPU)
        if gaussian:
            out_ref[...] = h
        else:
            # exp + approx reciprocal both ride the EUP slot (no VALU divide)
            out_ref[...] = pl.reciprocal(1.0 + jnp.exp(-h), approx=True)
    return kernel


# ----------------------------------------------------------------------------
# Forward: params already prepacked; only the batch dim is (maybe) padded.
# ----------------------------------------------------------------------------
def made_forward_pallas(x, packed_params, gaussian=False, tb=1024):
    B, d_in = x.shape
    n_layers = len(packed_params) // 2
    d_out = packed_params[-1].shape[1]                   # true (unpadded) d_out

    # Large batch tile (amortizes per-step grid overhead), multiple of 8,
    # clamped to the batch; if the whole batch fits in one tile, split in two
    # so both TensorCores get work on v7x megacore.
    B8 = _round_up(B, SUBLANE)
    tb = min(_round_up(tb, SUBLANE), B8)
    if tb >= B8 and B8 > SUBLANE:
        tb = ((B8 // SUBLANE + 1) // 2) * SUBLANE
    B_pad = _round_up(B, tb)

    x_p = x.astype(jnp.float32)
    if B_pad != B:
        x_p = jnp.zeros((B_pad, d_in), jnp.float32).at[:B, :].set(x_p)

    kernel = make_made_kernel(n_layers, gaussian)
    cparams = pltpu.CompilerParams(
        dimension_semantics=("parallel",),               # batch tiles -> 2 TCs on v7x
        vmem_limit_bytes=_vmem_limit_bytes(),
    )

    def _call(single_buffer_params):
        x_spec = pl.BlockSpec((tb, d_in), lambda i: (i, 0))
        if single_buffer_params:
            p_specs = [pl.BlockSpec(p.shape, lambda i: (0, 0),
                                    pipeline_mode=pl.Buffered(1))
                       for p in packed_params]
        else:
            p_specs = [pl.BlockSpec(p.shape, lambda i: (0, 0))
                       for p in packed_params]
        out_spec = pl.BlockSpec((tb, d_out), lambda i: (i, 0))
        return pl.pallas_call(
            kernel,
            out_shape=jax.ShapeDtypeStruct((B_pad, d_out), jnp.float32),
            grid=(B_pad // tb,),
            in_specs=[x_spec] + p_specs,
            out_specs=out_spec,
            compiler_params=cparams,
        )(x_p, *packed_params)

    try:
        out = _call(single_buffer_params=True)
    except Exception:
        # pl.Buffered(1) (single-buffered resident params) is an optimization;
        # fall back to default double-buffering if this build rejects it.
        out = _call(single_buffer_params=False)

    return out if B_pad == B else out[:B]


# ----------------------------------------------------------------------------
# Pure-JAX reference (unfused, unpadded, exact sigmoid) for correctness check.
# ----------------------------------------------------------------------------
def made_forward_ref(x, weights, masks, biases, gaussian=False):
    h = x
    n = len(weights)
    for i, (w, m, b) in enumerate(zip(weights, masks, biases)):
        h = h @ (jnp.asarray(m, jnp.float32) * w).T + b
        if i < n - 1:
            h = jnp.maximum(h, 0.0)
    return h if gaussian else jax.nn.sigmoid(h)


if __name__ == "__main__":
    # Small MADE config: d_in=8, hidden=[32, 32], non-gaussian (sigmoid output).
    d_in = 8
    hidden_dims = [32, 32]
    gaussian = False
    batch = 64

    masks = create_made_masks(d_in, hidden_dims, gaussian=gaussian,
                              random_order=False, seed=0)
    d_out = 2 * d_in if gaussian else d_in

    key = jax.random.PRNGKey(0)
    key, kx = jax.random.split(key)
    weights, biases = init_params(key, d_in, hidden_dims, d_out)
    x = jax.random.normal(kx, (batch, d_in), jnp.float32)

    ref = made_forward_ref(x, weights, masks, biases, gaussian=gaussian)

    # 1) f32-weight path: tight correctness check of the kernel structure
    #    (tolerance covers only the approx EUP reciprocal in the sigmoid).
    packed_f32 = prepack_made_params(weights, masks, biases,
                                     weight_dtype=jnp.float32)
    out_f32 = jax.block_until_ready(
        made_forward_pallas(x, packed_f32, gaussian=gaussian))
    np.testing.assert_allclose(np.asarray(out_f32), np.asarray(ref),
                               rtol=2e-3, atol=2e-3)

    # 2) Default perf path: bf16 weight storage (halves weight DMA/VMEM on all
    #    of v5e/v6e/v7x; MXU accumulates in f32).
    packed_bf16 = prepack_made_params(weights, masks, biases,
                                      weight_dtype=jnp.bfloat16)
    out_bf16 = jax.block_until_ready(
        made_forward_pallas(x, packed_bf16, gaussian=gaussian))
    np.testing.assert_allclose(np.asarray(out_bf16), np.asarray(ref),
                               rtol=5e-2, atol=5e-2)

    print("KERNEL_OK")
</pallas_src>

<mosaic_0001>
module attributes {stable_mosaic.version = 11 : i64} {
  func.func @kernel(%arg0: i32, %arg1: memref<32x8xf32, #tpu.memory_space<vmem>>, %arg2: memref<8x128xf32, #tpu.memory_space<vmem>>, %arg3: memref<1x128xf32, #tpu.memory_space<vmem>>, %arg4: memref<128x128xf32, #tpu.memory_space<vmem>>, %arg5: memref<1x128xf32, #tpu.memory_space<vmem>>, %arg6: memref<128x8xf32, #tpu.memory_space<vmem>>, %arg7: memref<1x8xf32, #tpu.memory_space<vmem>>, %arg8: memref<32x8xf32, #tpu.memory_space<vmem>>) attributes {dimension_semantics = [#tpu.dimension_semantics<parallel>], iteration_bounds = array<i64: 2>, scalar_prefetch = 0 : i64, scratch_operands = 0 : i64, tpu.core_type = #tpu.core_type<tc>, window_params = [{transform_indices = @transform_0, window_bounds = array<i64: 32, 8>}, {pipeline_mode = #tpu.pipeline_mode<synchronous>, transform_indices = @transform_1, window_bounds = array<i64: 8, 128>}, {pipeline_mode = #tpu.pipeline_mode<synchronous>, transform_indices = @transform_2, window_bounds = array<i64: 1, 128>}, {pipeline_mode = #tpu.pipeline_mode<synchronous>, transform_indices = @transform_3, window_bounds = array<i64: 128, 128>}, {pipeline_mode = #tpu.pipeline_mode<synchronous>, transform_indices = @transform_4, window_bounds = array<i64: 1, 128>}, {pipeline_mode = #tpu.pipeline_mode<synchronous>, transform_indices = @transform_5, window_bounds = array<i64: 128, 8>}, {pipeline_mode = #tpu.pipeline_mode<synchronous>, transform_indices = @transform_6, window_bounds = array<i64: 1, 8>}, {transform_indices = @transform_7, window_bounds = array<i64: 32, 8>}]} {
    %c0 = arith.constant 0 : index
    %c0_0 = arith.constant 0 : index
    %0 = vector.load %arg1[%c0, %c0_0] : memref<32x8xf32, #tpu.memory_space<vmem>>, vector<32x8xf32>
    %c0_1 = arith.constant 0 : index
    %c0_2 = arith.constant 0 : index
    %1 = vector.load %arg2[%c0_1, %c0_2] : memref<8x128xf32, #tpu.memory_space<vmem>>, vector<8x128xf32>
    %c0_3 = arith.constant 0 : index
    %c0_4 = arith.constant 0 : index
    %2 = vector.load %arg3[%c0_3, %c0_4] : memref<1x128xf32, #tpu.memory_space<vmem>>, vector<1x128xf32>
    %cst = arith.constant dense<0.000000e+00> : vector<32x128xf32>
    %3 = tpu.matmul %0, %1, %cst {dimension_numbers = #tpu.dot_dimension_numbers<[1], [0], [0], [1], [0, 0, 1, 1], [], []>} : vector<32x8xf32>, vector<8x128xf32>, vector<32x128xf32> -> vector<32x128xf32>
    %4 = vector.broadcast %2 : vector<1x128xf32> to vector<32x128xf32>
    %5 = arith.addf %3, %4 : vector<32x128xf32>
    %cst_5 = arith.constant 0.000000e+00 : f32
    %6 = vector.broadcast %cst_5 : f32 to vector<32x128xf32>
    %7 = arith.maximumf %5, %6 : vector<32x128xf32>
    %c0_6 = arith.constant 0 : index
    %c0_7 = arith.constant 0 : index
    %8 = vector.load %arg4[%c0_6, %c0_7] : memref<128x128xf32, #tpu.memory_space<vmem>>, vector<128x128xf32>
    %c0_8 = arith.constant 0 : index
    %c0_9 = arith.constant 0 : index
    %9 = vector.load %arg5[%c0_8, %c0_9] : memref<1x128xf32, #tpu.memory_space<vmem>>, vector<1x128xf32>
    %cst_10 = arith.constant dense<0.000000e+00> : vector<32x128xf32>
    %10 = tpu.matmul %7, %8, %cst_10 {dimension_numbers = #tpu.dot_dimension_numbers<[1], [0], [0], [1], [0, 0, 1, 1], [], []>} : vector<32x128xf32>, vector<128x128xf32>, vector<32x128xf32> -> vector<32x128xf32>
    %11 = vector.broadcast %9 : vector<1x128xf32> to vector<32x128xf32>
    %12 = arith.addf %10, %11 : vector<32x128xf32>
    %cst_11 = arith.constant 0.000000e+00 : f32
    %13 = vector.broadcast %cst_11 : f32 to vector<32x128xf32>
    %14 = arith.maximumf %12, %13 : vector<32x128xf32>
    %c0_12 = arith.constant 0 : index
    %c0_13 = arith.constant 0 : index
    %15 = vector.load %arg6[%c0_12, %c0_13] : memref<128x8xf32, #tpu.memory_space<vmem>>, vector<128x8xf32>
    %c0_14 = arith.constant 0 : index
    %c0_15 = arith.constant 0 : index
    %16 = vector.load %arg7[%c0_14, %c0_15] : memref<1x8xf32, #tpu.memory_space<vmem>>, vector<1x8xf32>
    %cst_16 = arith.constant dense<0.000000e+00> : vector<32x8xf32>
    %17 = tpu.matmul %14, %15, %cst_16 {dimension_numbers = #tpu.dot_dimension_numbers<[1], [0], [0], [1], [0, 0, 1, 1], [], []>} : vector<32x128xf32>, vector<128x8xf32>, vector<32x8xf32> -> vector<32x8xf32>
    %18 = vector.broadcast %16 : vector<1x8xf32> to vector<32x8xf32>
    %19 = arith.addf %17, %18 : vector<32x8xf32>
    %cst_17 = arith.constant 0.000000e+00 : f32
    %20 = vector.broadcast %cst_17 : f32 to vector<32x8xf32>
    %21 = arith.subf %20, %19 : vector<32x8xf32>
    %22 = math.exp %21 : vector<32x8xf32>
    %cst_18 = arith.constant 1.000000e+00 : f32
    %23 = vector.broadcast %cst_18 : f32 to vector<32x8xf32>
    %24 = arith.addf %23, %22 : vector<32x8xf32>
    %25 = tpu.reciprocal %24 {approx = true} : vector<32x8xf32> -> vector<32x8xf32>
    %c0_19 = arith.constant 0 : index
    %c0_20 = arith.constant 0 : index
    %26 = vector.load %arg8[%c0_19, %c0_20] : memref<32x8xf32, #tpu.memory_space<vmem>>, vector<32x8xf32>
    tpu.vector_store %arg8[%c0_19, %c0_20], %25 {strides = array<i32>} : memref<32x8xf32, #tpu.memory_space<vmem>>, vector<32x8xf32>,
    return
  }
  func.func @transform_0(%arg0: i32) -> (i32, i32) {
    %c0_i32 = arith.constant 0 : i32
    %c0_i32_0 = arith.constant 0 : i32
    return %arg0, %c0_i32 : i32, i32
  }
  func.func @transform_1(%arg0: i32) -> (i32, i32) {
    %c0_i32 = arith.constant 0 : i32
    %c0_i32_0 = arith.constant 0 : i32
    %c0_i32_1 = arith.constant 0 : i32
    return %c0_i32, %c0_i32_0 : i32, i32
  }
  func.func @transform_2(%arg0: i32) -> (i32, i32) {
    %c0_i32 = arith.constant 0 : i32
    %c0_i32_0 = arith.constant 0 : i32
    %c0_i32_1 = arith.constant 0 : i32
    return %c0_i32, %c0_i32_0 : i32, i32
  }
  func.func @transform_3(%arg0: i32) -> (i32, i32) {
    %c0_i32 = arith.constant 0 : i32
    %c0_i32_0 = arith.constant 0 : i32
    %c0_i32_1 = arith.constant 0 : i32
    return %c0_i32, %c0_i32_0 : i32, i32
  }
  func.func @transform_4(%arg0: i32) -> (i32, i32) {
    %c0_i32 = arith.constant 0 : i32
    %c0_i32_0 = arith.constant 0 : i32
    %c0_i32_1 = arith.constant 0 : i32
    return %c0_i32, %c0_i32_0 : i32, i32
  }
  func.func @transform_5(%arg0: i32) -> (i32, i32) {
    %c0_i32 = arith.constant 0 : i32
    %c0_i32_0 = arith.constant 0 : i32
    %c0_i32_1 = arith.constant 0 : i32
    return %c0_i32, %c0_i32_0 : i32, i32
  }
  func.func @transform_6(%arg0: i32) -> (i32, i32) {
    %c0_i32 = arith.constant 0 : i32
    %c0_i32_0 = arith.constant 0 : i32
    %c0_i32_1 = arith.constant 0 : i32
    return %c0_i32, %c0_i32_0 : i32, i32
  }
  func.func @transform_7(%arg0: i32) -> (i32, i32) {
    %c0_i32 = arith.constant 0 : i32
    %c0_i32_0 = arith.constant 0 : i32
    return %arg0, %c0_i32 : i32, i32
  }
}

module attributes {stable_mosaic.version = 11 : i64} {
  func.func @kernel(%arg0: i32, %arg1: memref<32x8xf32, #tpu.memory_space<vmem>>, %arg2: memref<8x128xf32, #tpu.memory_space<vmem>>, %arg3: memref<1x128xf32, #tpu.memory_space<vmem>>, %arg4: memref<128x128xf32, #tpu.memory_space<vmem>>, %arg5: memref<1x128xf32, #tpu.memory_space<vmem>>, %arg6: memref<128x8xf32, #tpu.memory_space<vmem>>, %arg7: memref<1x8xf32, #tpu.memory_space<vmem>>, %arg8: memref<32x8xf32, #tpu.memory_space<vmem>>) attributes {dimension_semantics = [#tpu.dimension_semantics<parallel>], iteration_bounds = array<i64: 2>, scalar_prefetch = 0 : i64, scratch_operands = 0 : i64, tpu.core_type = #tpu.core_type<tc>, window_params = [{transform_indices = @transform_0, window_bounds = array<i64: 32, 8>}, {pipeline_mode = #tpu.pipeline_mode<synchronous>, transform_indices = @transform_1, window_bounds = array<i64: 8, 128>}, {pipeline_mode = #tpu.pipeline_mode<synchronous>, transform_indices = @transform_2, window_bounds = array<i64: 1, 128>}, {pipeline_mode = #tpu.pipeline_mode<synchronous>, transform_indices = @transform_3, window_bounds = array<i64: 128, 128>}, {pipeline_mode = #tpu.pipeline_mode<synchronous>, transform_indices = @transform_4, window_bounds = array<i64: 1, 128>}, {pipeline_mode = #tpu.pipeline_mode<synchronous>, transform_indices = @transform_5, window_bounds = array<i64: 128, 8>}, {pipeline_mode = #tpu.pipeline_mode<synchronous>, transform_indices = @transform_6, window_bounds = array<i64: 1, 8>}, {transform_indices = @transform_7, window_bounds = array<i64: 32, 8>}]} {
    %c0 = arith.constant 0 : index
    %c0_0 = arith.constant 0 : index
    %0 = vector.load %arg1[%c0, %c0_0] : memref<32x8xf32, #tpu.memory_space<vmem>>, vector<32x8xf32>
    %c0_1 = arith.constant 0 : index
    %c0_2 = arith.constant 0 : index
    %1 = vector.load %arg2[%c0_1, %c0_2] : memref<8x128xf32, #tpu.memory_space<vmem>>, vector<8x128xf32>
    %c0_3 = arith.constant 0 : index
    %c0_4 = arith.constant 0 : index
    %2 = vector.load %arg3[%c0_3, %c0_4] : memref<1x128xf32, #tpu.memory_space<vmem>>, vector<1x128xf32>
    %cst = arith.constant dense<0.000000e+00> : vector<32x128xf32>
    %3 = tpu.matmul %0, %1, %cst {dimension_numbers = #tpu.dot_dimension_numbers<[1], [0], [0], [1], [0, 0, 1, 1], [], []>} : vector<32x8xf32>, vector<8x128xf32>, vector<32x128xf32> -> vector<32x128xf32>
    %4 = vector.broadcast %2 : vector<1x128xf32> to vector<32x128xf32>
    %5 = arith.addf %3, %4 : vector<32x128xf32>
    %cst_5 = arith.constant 0.000000e+00 : f32
    %6 = vector.broadcast %cst_5 : f32 to vector<32x128xf32>
    %7 = arith.maximumf %5, %6 : vector<32x128xf32>
    %c0_6 = arith.constant 0 : index
    %c0_7 = arith.constant 0 : index
    %8 = vector.load %arg4[%c0_6, %c0_7] : memref<128x128xf32, #tpu.memory_space<vmem>>, vector<128x128xf32>
    %c0_8 = arith.constant 0 : index
    %c0_9 = arith.constant 0 : index
    %9 = vector.load %arg5[%c0_8, %c0_9] : memref<1x128xf32, #tpu.memory_space<vmem>>, vector<1x128xf32>
    %cst_10 = arith.constant dense<0.000000e+00> : vector<32x128xf32>
    %10 = tpu.matmul %7, %8, %cst_10 {dimension_numbers = #tpu.dot_dimension_numbers<[1], [0], [0], [1], [0, 0, 1, 1], [], []>} : vector<32x128xf32>, vector<128x128xf32>, vector<32x128xf32> -> vector<32x128xf32>
    %11 = vector.broadcast %9 : vector<1x128xf32> to vector<32x128xf32>
    %12 = arith.addf %10, %11 : vector<32x128xf32>
    %cst_11 = arith.constant 0.000000e+00 : f32
    %13 = vector.broadcast %cst_11 : f32 to vector<32x128xf32>
    %14 = arith.maximumf %12, %13 : vector<32x128xf32>
    %c0_12 = arith.constant 0 : index
    %c0_13 = arith.constant 0 : index
    %15 = vector.load %arg6[%c0_12, %c0_13] : memref<128x8xf32, #tpu.memory_space<vmem>>, vector<128x8xf32>
    %c0_14 = arith.constant 0 : index
    %c0_15 = arith.constant 0 : index
    %16 = vector.load %arg7[%c0_14, %c0_15] : memref<1x8xf32, #tpu.memory_space<vmem>>, vector<1x8xf32>
    %cst_16 = arith.constant dense<0.000000e+00> : vector<32x8xf32>
    %17 = tpu.matmul %14, %15, %cst_16 {dimension_numbers = #tpu.dot_dimension_numbers<[1], [0], [0], [1], [0, 0, 1, 1], [], []>} : vector<32x128xf32>, vector<128x8xf32>, vector<32x8xf32> -> vector<32x8xf32>
    %18 = vector.broadcast %16 : vector<1x8xf32> to vector<32x8xf32>
    %19 = arith.addf %17, %18 : vector<32x8xf32>
    %cst_17 = arith.constant 0.000000e+00 : f32
    %20 = vector.broadcast %cst_17 : f32 to vector<32x8xf32>
    %21 = arith.subf %20, %19 : vector<32x8xf32>
    %22 = math.exp %21 : vector<32x8xf32>
    %cst_18 = arith.constant 1.000000e+00 : f32
    %23 = vector.broadcast %cst_18 : f32 to vector<32x8xf32>
    %24 = arith.addf %23, %22 : vector<32x8xf32>
    %25 = tpu.reciprocal %24 {approx = true} : vector<32x8xf32> -> vector<32x8xf32>
    %c0_19 = arith.constant 0 : index
    %c0_20 = arith.constant 0 : index
    %26 = vector.load %arg8[%c0_19, %c0_20] : memref<32x8xf32, #tpu.memory_space<vmem>>, vector<32x8xf32>
    tpu.vector_store %arg8[%c0_19, %c0_20], %25 {strides = array<i32>} : memref<32x8xf32, #tpu.memory_space<vmem>>, vector<32x8xf32>,
    return
  }
  func.func @transform_0(%arg0: i32) -> (i32, i32) {
    %c0_i32 = arith.constant 0 : i32
    %c0_i32_0 = arith.constant 0 : i32
    return %arg0, %c0_i32 : i32, i32
  }
  func.func @transform_1(%arg0: i32) -> (i32, i32) {
    %c0_i32 = arith.constant 0 : i32
    %c0_i32_0 = arith.constant 0 : i32
    %c0_i32_1 = arith.constant 0 : i32
    return %c0_i32, %c0_i32_0 : i32, i32
  }
  func.func @transform_2(%arg0: i32) -> (i32, i32) {
    %c0_i32 = arith.constant 0 : i32
    %c0_i32_0 = arith.constant 0 : i32
    %c0_i32_1 = arith.constant 0 : i32
    return %c0_i32, %c0_i32_0 : i32, i32
  }
  func.func @transform_3(%arg0: i32) -> (i32, i32) {
    %c0_i32 = arith.constant 0 : i32
    %c0_i32_0 = arith.constant 0 : i32
    %c0_i32_1 = arith.constant 0 : i32
    return %c0_i32, %c0_i32_0 : i32, i32
  }
  func.func @transform_4(%arg0: i32) -> (i32, i32) {
    %c0_i32 = arith.constant 0 : i32
    %c0_i32_0 = arith.constant 0 : i32
    %c0_i32_1 = arith.constant 0 : i32
    return %c0_i32, %c0_i32_0 : i32, i32
  }
  func.func @transform_5(%arg0: i32) -> (i32, i32) {
    %c0_i32 = arith.constant 0 : i32
    %c0_i32_0 = arith.constant 0 : i32
    %c0_i32_1 = arith.constant 0 : i32
    return %c0_i32, %c0_i32_0 : i32, i32
  }
  func.func @transform_6(%arg0: i32) -> (i32, i32) {
    %c0_i32 = arith.constant 0 : i32
    %c0_i32_0 = arith.constant 0 : i32
    %c0_i32_1 = arith.constant 0 : i32
    return %c0_i32, %c0_i32_0 : i32, i32
  }
  func.func @transform_7(%arg0: i32) -> (i32, i32) {
    %c0_i32 = arith.constant 0 : i32
    %c0_i32_0 = arith.constant 0 : i32
    return %arg0, %c0_i32 : i32, i32
  }
}

</mosaic_0001>

<llo_original>
// kernel: tpu_custom_call.1
$region0: #{tpu_custom_call.1}
  #allocation0 [shape = 'u32[]', space=smem, size = 0x4, offset = 0x4, fixed_abs, tag = 'smem constant byte address 0x4 - core index']
  #allocation1 [shape = 'u32[72,128]{1,0:T(1,128)}', space=vmem, size = 0x9000, scoped, tag = 'internal scratch']
  %s0 = inlined_call_operand.vmem [shape: f32[64,8], index: 0, kind: input, shape index: {}]
  %s1 = inlined_call_operand.vmem [shape: f32[8,128], index: 1, kind: input, shape index: {}]
  %s2 = inlined_call_operand.vmem [shape: f32[1,128], index: 2, kind: input, shape index: {}]
  %s3 = inlined_call_operand.vmem [shape: f32[128,128], index: 3, kind: input, shape index: {}]
  %s4 = inlined_call_operand.vmem [shape: f32[1,128], index: 4, kind: input, shape index: {}]
  %s5 = inlined_call_operand.vmem [shape: f32[128,8], index: 5, kind: input, shape index: {}]
  %s6 = inlined_call_operand.vmem [shape: f32[1,8], index: 6, kind: input, shape index: {}]
  %s7 = inlined_call_operand.vmem [shape: f32[64,8], index: 7, kind: output, shape index: {}]
  %s8 = sld [smem:[#allocation0]]
  $region61: #{tpu_custom_call.1} parent=0
    _
  %s10 = ssub.s32 1, %s8
  %s11 = scalar_select 0, %s10, %s8
  loop: start=0, step=1, limit=4
  $region2: #{tpu_custom_call.1} parent=0 // loop_pre_header
    _
  $region3: #{tpu_custom_call.1} parent=0 // loop_header
    %s13 = sphi 0, %s17
    %p14 = scmp.ge.s32.totalorder %s13, 4
    %s23 = sphi 0, %s25
    %s26 = sphi 0, %s23
    %s27 = sphi 0, %s26
    %s43 = sphi 0, %s27
    %s47 = sphi 0, %s47
    %s49 = sphi 0, %s47
    %s50 = sphi 0, %s49
    %s64 = sphi 0, %s50
    %s68 = sphi 0, %s68
    %s70 = sphi 0, %s68
    %s71 = sphi 0, %s70
    %s85 = sphi 0, %s71
    %s89 = sphi 0, %s89
    %s91 = sphi 0, %s89
    %s92 = sphi 0, %s91
    %s106 = sphi 0, %s92
    %s110 = sphi 0, %s110
    %s112 = sphi 0, %s110
    %s113 = sphi 0, %s112
    %s127 = sphi 0, %s113
    %s131 = sphi 0, %s131
    %s133 = sphi 0, %s131
    %s134 = sphi 0, %s133
    %s148 = sphi 0, %s134
    %s152 = sphi 0, %s152
    %s154 = sphi 0, %s152
    %s155 = sphi 0, %s154
    %s169 = sphi 0, %s155
    %s175 = sphi 0, %s177
    %s178 = sphi 0, %s175
    %s179 = sphi 0, %s178
    %s195 = sphi 0, %s179
  $region4: #{tpu_custom_call.1} parent=0 // loop_header_branch
    %16 = sbr.rel (%p14) target = $region8
  $region5: #{tpu_custom_call.1} parent=0 // loop_body
    %s18 = ssub.s32 %s13, 1
    %s19 = ssub.s32 %s13, 2
    %s20 = sadd.s32 %s13, 1
    %s21 = ssub.s32 %s13, %s20
    %p22 = scmp.eq.s32.totalorder %s21, 0
    %s24 = sadd.s32 %s23, 1
    %s25 = scalar_select %p22, %s23, %s24
    %p28 = pneg %p22
    %p29 = scmp.eq.s32.totalorder %s13, 1
    %p30 = por %p28, %p29
    %p31 = scmp.ne.s32.totalorder %s23, %s26
    %p32 = scmp.eq.s32.totalorder %s13, 0
    %p33 = por %p31, %p32
    %p34 = scmp.ne.s32.totalorder %s23, %s26
    %p35 = scmp.eq.s32.totalorder %s18, 1
    %p36 = por %p34, %p35
    %p37 = scmp.ne.s32.totalorder %s26, %s27
    %p38 = scmp.eq.s32.totalorder %s18, 0
    %p39 = por %p37, %p38
    %p40 = scmp.ne.s32.totalorder %s26, %s27
    %p41 = scmp.eq.s32.totalorder %s19, 1
    %p42 = por %p40, %p41
    %p44 = scmp.ne.s32.totalorder %s27, %s43
    %p45 = scmp.eq.s32.totalorder %s19, 0
    %p46 = por %p44, %p45
    %s48 = sadd.s32 %s47, 1
    %p51 = scmp.eq.s32.totalorder %s13, 1
    %p52 = scmp.ne.s32.totalorder %s47, %s49
    %p53 = scmp.eq.s32.totalorder %s13, 0
    %p54 = por %p52, %p53
    %p55 = scmp.ne.s32.totalorder %s47, %s49
    %p56 = scmp.eq.s32.totalorder %s18, 1
    %p57 = por %p55, %p56
    %p58 = scmp.ne.s32.totalorder %s49, %s50
    %p59 = scmp.eq.s32.totalorder %s18, 0
    %p60 = por %p58, %p59
    %p61 = scmp.ne.s32.totalorder %s49, %s50
    %p62 = scmp.eq.s32.totalorder %s19, 1
    %p63 = por %p61, %p62
    %p65 = scmp.ne.s32.totalorder %s50, %s64
    %p66 = scmp.eq.s32.totalorder %s19, 0
    %p67 = por %p65, %p66
    %s69 = sadd.s32 %s68, 1
    %p72 = scmp.eq.s32.totalorder %s13, 1
    %p73 = scmp.ne.s32.totalorder %s68, %s70
    %p74 = scmp.eq.s32.totalorder %s13, 0
    %p75 = por %p73, %p74
    %p76 = scmp.ne.s32.totalorder %s68, %s70
    %p77 = scmp.eq.s32.totalorder %s18, 1
    %p78 = por %p76, %p77
    %p79 = scmp.ne.s32.totalorder %s70, %s71
    %p80 = scmp.eq.s32.totalorder %s18, 0
    %p81 = por %p79, %p80
    %p82 = scmp.ne.s32.totalorder %s70, %s71
    %p83 = scmp.eq.s32.totalorder %s19, 1
    %p84 = por %p82, %p83
    %p86 = scmp.ne.s32.totalorder %s71, %s85
    %p87 = scmp.eq.s32.totalorder %s19, 0
    %p88 = por %p86, %p87
    %s90 = sadd.s32 %s89, 1
    %p93 = scmp.eq.s32.totalorder %s13, 1
    %p94 = scmp.ne.s32.totalorder %s89, %s91
    %p95 = scmp.eq.s32.totalorder %s13, 0
    %p96 = por %p94, %p95
    %p97 = scmp.ne.s32.totalorder %s89, %s91
    %p98 = scmp.eq.s32.totalorder %s18, 1
    %p99 = por %p97, %p98
    %p100 = scmp.ne.s32.totalorder %s91, %s92
    %p101 = scmp.eq.s32.totalorder %s18, 0
    %p102 = por %p100, %p101
    %p103 = scmp.ne.s32.totalorder %s91, %s92
    %p104 = scmp.eq.s32.totalorder %s19, 1
    %p105 = por %p103, %p104
    %p107 = scmp.ne.s32.totalorder %s92, %s106
    %p108 = scmp.eq.s32.totalorder %s19, 0
    %p109 = por %p107, %p108
    %s111 = sadd.s32 %s110, 1
    %p114 = scmp.eq.s32.totalorder %s13, 1
    %p115 = scmp.ne.s32.totalorder %s110, %s112
    %p116 = scmp.eq.s32.totalorder %s13, 0
    %p117 = por %p115, %p116
    %p118 = scmp.ne.s32.totalorder %s110, %s112
    %p119 = scmp.eq.s32.totalorder %s18, 1
    %p120 = por %p118, %p119
    %p121 = scmp.ne.s32.totalorder %s112, %s113
    %p122 = scmp.eq.s32.totalorder %s18, 0
    %p123 = por %p121, %p122
    %p124 = scmp.ne.s32.totalorder %s112, %s113
    %p125 = scmp.eq.s32.totalorder %s19, 1
    %p126 = por %p124, %p125
    %p128 = scmp.ne.s32.totalorder %s113, %s127
    %p129 = scmp.eq.s32.totalorder %s19, 0
    %p130 = por %p128, %p129
    %s132 = sadd.s32 %s131, 1
    %p135 = scmp.eq.s32.totalorder %s13, 1
    %p136 = scmp.ne.s32.totalorder %s131, %s133
    %p137 = scmp.eq.s32.totalorder %s13, 0
    %p138 = por %p136, %p137
    %p139 = scmp.ne.s32.totalorder %s131, %s133
    %p140 = scmp.eq.s32.totalorder %s18, 1
    %p141 = por %p139, %p140
    %p142 = scmp.ne.s32.totalorder %s133, %s134
    %p143 = scmp.eq.s32.totalorder %s18, 0
    %p144 = por %p142, %p143
    %p145 = scmp.ne.s32.totalorder %s133, %s134
    %p146 = scmp.eq.s32.totalorder %s19, 1
    %p147 = por %p145, %p146
    %p149 = scmp.ne.s32.totalorder %s134, %s148
    %p150 = scmp.eq.s32.totalorder %s19, 0
    %p151 = por %p149, %p150
    %s153 = sadd.s32 %s152, 1
    %p156 = scmp.eq.s32.totalorder %s13, 1
    %p157 = scmp.ne.s32.totalorder %s152, %s154
    %p158 = scmp.eq.s32.totalorder %s13, 0
    %p159 = por %p157, %p158
    %p160 = scmp.ne.s32.totalorder %s152, %s154
    %p161 = scmp.eq.s32.totalorder %s18, 1
    %p162 = por %p160, %p161
    %p163 = scmp.ne.s32.totalorder %s154, %s155
    %p164 = scmp.eq.s32.totalorder %s18, 0
    %p165 = por %p163, %p164
    %p166 = scmp.ne.s32.totalorder %s154, %s155
    %p167 = scmp.eq.s32.totalorder %s19, 1
    %p168 = por %p166, %p167
    %p170 = scmp.ne.s32.totalorder %s155, %s169
    %p171 = scmp.eq.s32.totalorder %s19, 0
    %p172 = por %p170, %p171
    %s173 = ssub.s32 %s13, %s20
    %p174 = scmp.eq.s32.totalorder %s173, 0
    %s176 = sadd.s32 %s175, 1
    %s177 = scalar_select %p174, %s175, %s176
    %p180 = pneg %p174
    %p181 = scmp.eq.s32.totalorder %s13, 1
    %p182 = por %p180, %p181
    %p183 = scmp.ne.s32.totalorder %s175, %s178
    %p184 = scmp.eq.s32.totalorder %s13, 0
    %p185 = por %p183, %p184
    %p186 = scmp.ne.s32.totalorder %s175, %s178
    %p187 = scmp.eq.s32.totalorder %s18, 1
    %p188 = por %p186, %p187
    %p189 = scmp.ne.s32.totalorder %s178, %s179
    %p190 = scmp.eq.s32.totalorder %s18, 0
    %p191 = por %p189, %p190
    %p192 = scmp.ne.s32.totalorder %s178, %s179
    %p193 = scmp.eq.s32.totalorder %s19, 1
    %p194 = por %p192, %p193
    %p196 = scmp.ne.s32.totalorder %s179, %s195
    %p197 = scmp.eq.s32.totalorder %s19, 0
    %p198 = por %p196, %p197
    %p199 = scmp.le.s32.totalorder 1, %s13
    %p200 = scmp.lt.s32.totalorder %s13, 3
    %p201 = pnand %p199, %p200
    %p202 = pneg %p201
    // Predicated region
    $region9: #{tpu_custom_call.1} parent=5 // pred_check
      _
    $region10: #{tpu_custom_call.1} parent=5 // pred_check_branch
      %204 = sbr.rel (%p201) target = $region12
    $region11: #{tpu_custom_call.1} parent=5 // pred_region
      %s205 = ssub.s32 %s13, 1
      // Predicated region
      $region13: #{tpu_custom_call.1} parent=11 // pred_check
        %p206 = pneg %p60
      $region14: #{tpu_custom_call.1} parent=11 // pred_check_branch
        %208 = sbr.rel (%p206) target = $region16
      $region15: #{tpu_custom_call.1} parent=11 // pred_region
        _
      $region16: #{tpu_custom_call.1} parent=11 // pred_fallthru
        _
      // Predicated region
      $region17: #{tpu_custom_call.1} parent=11 // pred_check
        %p209 = pneg %p81
      $region18: #{tpu_custom_call.1} parent=11 // pred_check_branch
        %211 = sbr.rel (%p209) target = $region20
      $region19: #{tpu_custom_call.1} parent=11 // pred_region
        _
      $region20: #{tpu_custom_call.1} parent=11 // pred_fallthru
        _
      // Predicated region
      $region21: #{tpu_custom_call.1} parent=11 // pred_check
        %p212 = pneg %p102
      $region22: #{tpu_custom_call.1} parent=11 // pred_check_branch
        %214 = sbr.rel (%p212) target = $region24
      $region23: #{tpu_custom_call.1} parent=11 // pred_region
        _
      $region24: #{tpu_custom_call.1} parent=11 // pred_fallthru
        _
      // Predicated region
      $region25: #{tpu_custom_call.1} parent=11 // pred_check
        %p215 = pneg %p123
      $region26: #{tpu_custom_call.1} parent=11 // pred_check_branch
        %217 = sbr.rel (%p215) target = $region28
      $region27: #{tpu_custom_call.1} parent=11 // pred_region
        _
      $region28: #{tpu_custom_call.1} parent=11 // pred_fallthru
        _
      // Predicated region
      $region29: #{tpu_custom_call.1} parent=11 // pred_check
        %p218 = pneg %p144
      $region30: #{tpu_custom_call.1} parent=11 // pred_check_branch
        %220 = sbr.rel (%p218) target = $region32
      $region31: #{tpu_custom_call.1} parent=11 // pred_region
        _
      $region32: #{tpu_custom_call.1} parent=11 // pred_fallthru
        _
      // Predicated region
      $region33: #{tpu_custom_call.1} parent=11 // pred_check
        %p221 = pneg %p165
      $region34: #{tpu_custom_call.1} parent=11 // pred_check_branch
        %223 = sbr.rel (%p221) target = $region36
      $region35: #{tpu_custom_call.1} parent=11 // pred_region
        _
      $region36: #{tpu_custom_call.1} parent=11 // pred_fallthru
        _
    $region12: #{tpu_custom_call.1} parent=5 // pred_fallthru
      _
    %p224 = scmp.lt.s32.totalorder %s13, 2
    // Predicated region
    $region37: #{tpu_custom_call.1} parent=5 // pred_check
      %p225 = pneg %p224
    $region38: #{tpu_custom_call.1} parent=5 // pred_check_branch
      %227 = sbr.rel (%p225) target = $region40
    $region39: #{tpu_custom_call.1} parent=5 // pred_region
      // Predicated region
      $region41: #{tpu_custom_call.1} parent=39 // pred_check
        %p228 = pneg %p33
      $region42: #{tpu_custom_call.1} parent=39 // pred_check_branch
        %230 = sbr.rel (%p228) target = $region44
      $region43: #{tpu_custom_call.1} parent=39 // pred_region
        %s231 = smul.u32 4, %s13
        %p232 = scmp.lt.s32.totalorder %s231, 7
        %s233 = scalar_select %p232, %s231, 7
        %s234 = smul.addr %s233, 8
        %s235 = scalar_lea.vmem %s0, %s234
        %s236 = smul.u32 4, %s13
      $region44: #{tpu_custom_call.1} parent=39 // pred_fallthru
        _
    $region40: #{tpu_custom_call.1} parent=5 // pred_fallthru
      _
    %p237 = scmp.le.s32.totalorder 1, %s13
    %p238 = scmp.lt.s32.totalorder %s13, 3
    %p239 = pnand %p237, %p238
    %p240 = pneg %p239
    // Predicated region
    $region45: #{tpu_custom_call.1} parent=5 // pred_check
      _
    $region46: #{tpu_custom_call.1} parent=5 // pred_check_branch
      %242 = sbr.rel (%p239) target = $region48
    $region47: #{tpu_custom_call.1} parent=5 // pred_region
      %s243 = ssub.s32 %s13, 1
      %s244 = smul.u32 4, %s18
      %p245 = scmp.lt.s32.totalorder %s244, 7
      %s246 = scalar_select %p245, %s244, 7
      %s247 = smul.addr %s246, 8
      %s248 = scalar_lea.vmem %s0, %s247
      %p249 = pneg %p39
      %p250 = pneg %p36
      %p251 = pneg %p60
      %p252 = pneg %p57
      %p253 = pneg %p81
      %p254 = pneg %p78
      %p255 = pneg %p102
      %p256 = pneg %p99
      %p257 = pneg %p123
      %p258 = pneg %p120
      %p259 = pneg %p144
      %p260 = pneg %p141
      %p261 = pneg %p165
      %p262 = pneg %p162
      %p263 = pneg %p191
      %p264 = pneg %p188
      %s265 = smul.u32 4, %s18
      %p266 = scmp.lt.s32.totalorder %s265, 7
      %s267 = scalar_select %p266, %s265, 7
      %s268 = smul.addr %s267, 8
      %s269 = scalar_lea.vmem %s7, %s268
      %s270 = smul.u32 4, %s18
      %p271 = scmp.lt.s32.totalorder %s270, 7
      %s272 = scalar_select %p271, %s270, 7
      %s273 = smul.addr %s272, 8
      %s274 = scalar_lea.vmem %s0, %s273
      %s275 = smul.u32 4, %s18
      %s276 = smul.u32 4, %s18
      %p277 = scmp.lt.s32.totalorder %s276, 7
      %s278 = scalar_select %p277, %s276, 7
      %s279 = smul.addr %s278, 8
      %s280 = scalar_lea.vmem %s7, %s279
      %s281 = smul.u32 4, %s18
      %v282 = vld [vmem:[%s274] sm:$0xff]
      %v283 = vld [vmem:[%s274 + $0x8] sm:$0xff]
      %v284 = vld [vmem:[%s274 + $0x10] sm:$0xff]
      %v285 = vld [vmem:[%s274 + $0x18] sm:$0xff]
      %v286 = vld [vmem:[%s1] sm:$0xff]
      %v287 = vld [vmem:[%s2] sm:$0x1]
      %v289 = vperm.slane %v287, 0
      %vm291 = vcmask 64512
      %v293 = vsel %vm291, %v282, 0
      %v296 = vsel %vm291, %v283, 0
      %v299 = vsel %vm291, %v284, 0
      %v302 = vsel %vm291, %v285, 0
      %304 = vmatpush.msra.mxu0 0.0
      %305 = vmatpush.msra.mxu0 0.0
      %306 = vmatpush.msra.mxu0 0.0
      %307 = vmatpush.msra.mxu0 0.0
      %308 = vmatpush.msra.mxu0 0.0
      %309 = vmatpush.msra.mxu0 0.0
      %310 = vmatpush.msra.mxu0 0.0
      %311 = vmatpush.msra.mxu0 0.0
      %312 = vmatpush.msra.mxu0 0.0
      %313 = vmatpush.msra.mxu0 0.0
      %314 = vmatpush.msra.mxu0 0.0
      %315 = vmatpush.msra.mxu0 0.0
      %316 = vmatpush.msra.mxu0 0.0
      %317 = vmatpush.msra.mxu0 0.0
      %318 = vmatpush.msra.mxu0 0.0
      %319 = vmatpush.msra.mxu0 %v286
      %320 = vmatmul.f32.gmra.mxu0 %v293
      %v321 = vpop.f32.mrf.mxu0
      %v322 = vadd.f32 %v289, %v321
      %323 = vmatmul.f32.gmra.mxu0 %v296
      %v324 = vpop.f32.mrf.mxu0
      %v325 = vadd.f32 %v289, %v324
      %326 = vmatmul.f32.gmra.mxu0 %v299
      %v327 = vpop.f32.mrf.mxu0
      %v328 = vadd.f32 %v289, %v327
      %329 = vmatmul.f32.gmra.mxu0 %v302
      %v330 = vpop.f32.mrf.mxu0
      %v331 = vadd.f32 %v289, %v330
      %332 = vdwg.mxu0
      %v333 = vmax.f32 %v322, 0.0
      %v334 = vmax.f32 %v325, 0.0
      %v335 = vmax.f32 %v328, 0.0
      %v336 = vmax.f32 %v331, 0.0
      %v337 = vld [vmem:[%s3] sm:$0xff]
      %v338 = vld [vmem:[%s3 + $0x8] sm:$0xff]
      %v339 = vld [vmem:[%s3 + $0x10] sm:$0xff]
      %v340 = vld [vmem:[%s3 + $0x18] sm:$0xff]
      %v341 = vld [vmem:[%s3 + $0x20] sm:$0xff]
      %v342 = vld [vmem:[%s3 + $0x28] sm:$0xff]
      %v343 = vld [vmem:[%s3 + $0x30] sm:$0xff]
      %v344 = vld [vmem:[%s3 + $0x38] sm:$0xff]
      %v345 = vld [vmem:[%s3 + $0x40] sm:$0xff]
      %v346 = vld [vmem:[%s3 + $0x48] sm:$0xff]
      %v347 = vld [vmem:[%s3 + $0x50] sm:$0xff]
      %v348 = vld [vmem:[%s3 + $0x58] sm:$0xff]
      %v349 = vld [vmem:[%s3 + $0x60] sm:$0xff]
      %v350 = vld [vmem:[%s3 + $0x68] sm:$0xff]
      %v351 = vld [vmem:[%s3 + $0x70] sm:$0xff]
      %v352 = vld [vmem:[%s3 + $0x78] sm:$0xff]
      %v353 = vld [vmem:[%s4] sm:$0x1]
      %v355 = vperm.slane %v353, 0
      %357 = vmatpush.msra.mxu0 %v352
      %358 = vmatpush.msra.mxu0 %v351
      %359 = vmatpush.msra.mxu0 %v350
      %360 = vmatpush.msra.mxu0 %v349
      %361 = vmatpush.msra.mxu0 %v348
      %362 = vmatpush.msra.mxu0 %v347
      %363 = vmatpush.msra.mxu0 %v346
      %364 = vmatpush.msra.mxu0 %v345
      %365 = vmatpush.msra.mxu0 %v344
      %366 = vmatpush.msra.mxu0 %v343
      %367 = vmatpush.msra.mxu0 %v342
      %368 = vmatpush.msra.mxu0 %v341
      %369 = vmatpush.msra.mxu0 %v340
      %370 = vmatpush.msra.mxu0 %v339
      %371 = vmatpush.msra.mxu0 %v338
      %372 = vmatpush.msra.mxu0 %v337
      %373 = vmatmul.f32.gmra.mxu0 %v333
      %v374 = vpop.f32.mrf.mxu0
      %v375 = vadd.f32 %v355, %v374
      %376 = vmatmul.f32.gmra.mxu0 %v334
      %v377 = vpop.f32.mrf.mxu0
      %v378 = vadd.f32 %v355, %v377
      %379 = vmatmul.f32.gmra.mxu0 %v335
      %v380 = vpop.f32.mrf.mxu0
      %v381 = vadd.f32 %v355, %v380
      %382 = vmatmul.f32.gmra.mxu0 %v336
      %v383 = vpop.f32.mrf.mxu0
      %v384 = vadd.f32 %v355, %v383
      %385 = vdwg.mxu0
      %v386 = vmax.f32 %v375, 0.0
      %v387 = vmax.f32 %v378, 0.0
      %v388 = vmax.f32 %v381, 0.0
      %v389 = vmax.f32 %v384, 0.0
      %v390 = vld [vmem:[%s5] sm:$0xff]
      %v391 = vld [vmem:[%s5 + $0x8] sm:$0xff]
      %v392 = vld [vmem:[%s5 + $0x10] sm:$0xff]
      %v393 = vld [vmem:[%s5 + $0x18] sm:$0xff]
      %v394 = vld [vmem:[%s5 + $0x20] sm:$0xff]
      %v395 = vld [vmem:[%s5 + $0x28] sm:$0xff]
      %v396 = vld [vmem:[%s5 + $0x30] sm:$0xff]
      %v397 = vld [vmem:[%s5 + $0x38] sm:$0xff]
      %v398 = vld [vmem:[%s5 + $0x40] sm:$0xff]
      %v399 = vld [vmem:[%s5 + $0x48] sm:$0xff]
      %v400 = vld [vmem:[%s5 + $0x50] sm:$0xff]
      %v401 = vld [vmem:[%s5 + $0x58] sm:$0xff]
      %v402 = vld [vmem:[%s5 + $0x60] sm:$0xff]
      %v403 = vld [vmem:[%s5 + $0x68] sm:$0xff]
      %v404 = vld [vmem:[%s5 + $0x70] sm:$0xff]
      %v405 = vld [vmem:[%s5 + $0x78] sm:$0xff]
      %v406 = vld [vmem:[%s6] sm:$0x1]
      %v408 = vperm.slane %v406, 0
      %410 = vmatpush.msra.mxu0 %v405
      %411 = vmatpush.msra.mxu0 %v404
      %412 = vmatpush.msra.mxu0 %v403
      %413 = vmatpush.msra.mxu0 %v402
      %414 = vmatpush.msra.mxu0 %v401
      %415 = vmatpush.msra.mxu0 %v400
      %416 = vmatpush.msra.mxu0 %v399
      %417 = vmatpush.msra.mxu0 %v398
      %418 = vmatpush.msra.mxu0 %v397
      %419 = vmatpush.msra.mxu0 %v396
      %420 = vmatpush.msra.mxu0 %v395
      %421 = vmatpush.msra.mxu0 %v394
      %422 = vmatpush.msra.mxu0 %v393
      %423 = vmatpush.msra.mxu0 %v392
      %424 = vmatpush.msra.mxu0 %v391
      %425 = vmatpush.msra.mxu0 %v390
      %426 = vmatmul.f32.gmra.mxu0 %v386
      %v427 = vpop.f32.mrf.mxu0
      %v428 = vadd.f32 %v408, %v427
      %429 = vmatmul.f32.gmra.mxu0 %v387
      %v430 = vpop.f32.mrf.mxu0
      %v431 = vadd.f32 %v408, %v430
      %432 = vmatmul.f32.gmra.mxu0 %v388
      %v433 = vpop.f32.mrf.mxu0
      %v434 = vadd.f32 %v408, %v433
      %435 = vmatmul.f32.gmra.mxu0 %v389
      %v436 = vpop.f32.mrf.mxu0
      %v437 = vadd.f32 %v408, %v436
      %438 = vdwg.mxu0
      %v439 = vsub.f32 0.0, %v428
      %v440 = vsub.f32 0.0, %v431
      %v441 = vsub.f32 0.0, %v434
      %v442 = vsub.f32 0.0, %v437
      %v443 = vmul.f32 %v439, 1.442695
      %v444 = vpow.pop %v443
      %v445 = vmul.f32 %v440, 1.442695
      %v446 = vpow.pop %v445
      %v447 = vmul.f32 %v441, 1.442695
      %v448 = vpow.pop %v447
      %v449 = vmul.f32 %v442, 1.442695
      %v450 = vpow.pop %v449
      %v451 = vadd.f32 %v444, 1.0
      %v452 = vadd.f32 %v446, 1.0
      %v453 = vadd.f32 %v448, 1.0
      %v454 = vadd.f32 %v450, 1.0
      %v455 = vrcp.pop %v451
      %v456 = vrcp.pop %v452
      %v457 = vrcp.pop %v453
      %v458 = vrcp.pop %v454
      %459 = vst.msk [vmem:[%s280] sm:$0xff] %vm291, %v455
      %460 = vst.msk [vmem:[%s280 + $0x8] sm:$0xff] %vm291, %v456
      %461 = vst.msk [vmem:[%s280 + $0x10] sm:$0xff] %vm291, %v457
      %462 = vst.msk [vmem:[%s280 + $0x18] sm:$0xff] %vm291, %v458
      %s463 = smul.u32 4, %s18
      %p464 = scmp.lt.s32.totalorder %s463, 7
      %s465 = scalar_select %p464, %s463, 7
      %s466 = smul.addr %s465, 8
      %s467 = scalar_lea.vmem %s7, %s466
      // Predicated region
      $region49: #{tpu_custom_call.1} parent=47 // pred_check
        %p468 = pneg %p188
      $region50: #{tpu_custom_call.1} parent=47 // pred_check_branch
        %470 = sbr.rel (%p468) target = $region52
      $region51: #{tpu_custom_call.1} parent=47 // pred_region
        %s471 = smul.u32 4, %s18
      $region52: #{tpu_custom_call.1} parent=47 // pred_fallthru
        _
    $region48: #{tpu_custom_call.1} parent=5 // pred_fallthru
      _
    %p472 = scmp.le.s32.totalorder 2, %s13
    // Predicated region
    $region53: #{tpu_custom_call.1} parent=5 // pred_check
      %p473 = pneg %p472
    $region54: #{tpu_custom_call.1} parent=5 // pred_check_branch
      %475 = sbr.rel (%p473) target = $region56
    $region55: #{tpu_custom_call.1} parent=5 // pred_region
      %s476 = ssub.s32 %s13, 2
      // Predicated region
      $region57: #{tpu_custom_call.1} parent=55 // pred_check
        %p477 = pneg %p194
      $region58: #{tpu_custom_call.1} parent=55 // pred_check_branch
        %479 = sbr.rel (%p477) target = $region60
      $region59: #{tpu_custom_call.1} parent=55 // pred_region
        %s480 = smul.u32 4, %s19
        %p481 = scmp.lt.s32.totalorder %s480, 7
        %s482 = scalar_select %p481, %s480, 7
        %s483 = smul.addr %s482, 8
        %s484 = scalar_lea.vmem %s7, %s483
      $region60: #{tpu_custom_call.1} parent=55 // pred_fallthru
        _
    $region56: #{tpu_custom_call.1} parent=5 // pred_fallthru
      _
  $region6: #{tpu_custom_call.1} parent=0 // loop_footer
    %s17 = sadd.s32 1, %s13
  $region7: #{tpu_custom_call.1} parent=0 // loop_footer_branch
    %12 = sbr.rel target = $region3
  $region8: #{tpu_custom_call.1} parent=0 // loop_exit
    _

// kernel: tpu_custom_call.1
$region0: #{tpu_custom_call.1}
  #allocation0 [shape = 'u32[]', space=smem, size = 0x4, offset = 0x4, fixed_abs, tag = 'smem constant byte address 0x4 - core index']
  #allocation1 [shape = 'u32[72,128]{1,0:T(1,128)}', space=vmem, size = 0x9000, scoped, tag = 'internal scratch']
  %s0 = inlined_call_operand.vmem [shape: f32[64,8], index: 0, kind: input, shape index: {}]
  %s1 = inlined_call_operand.vmem [shape: f32[8,128], index: 1, kind: input, shape index: {}]
  %s2 = inlined_call_operand.vmem [shape: f32[1,128], index: 2, kind: input, shape index: {}]
  %s3 = inlined_call_operand.vmem [shape: f32[128,128], index: 3, kind: input, shape index: {}]
  %s4 = inlined_call_operand.vmem [shape: f32[1,128], index: 4, kind: input, shape index: {}]
  %s5 = inlined_call_operand.vmem [shape: f32[128,8], index: 5, kind: input, shape index: {}]
  %s6 = inlined_call_operand.vmem [shape: f32[1,8], index: 6, kind: input, shape index: {}]
  %s7 = inlined_call_operand.vmem [shape: f32[64,8], index: 7, kind: output, shape index: {}]
  %s8 = sld [smem:[#allocation0]]
  $region61: #{tpu_custom_call.1} parent=0
    _
  %s10 = ssub.s32 1, %s8
  %s11 = scalar_select 0, %s10, %s8
  loop: start=0, step=1, limit=4
  $region2: #{tpu_custom_call.1} parent=0 // loop_pre_header
    _
  $region3: #{tpu_custom_call.1} parent=0 // loop_header
    %s13 = sphi 0, %s17
    %p14 = scmp.ge.s32.totalorder %s13, 4
    %s23 = sphi 0, %s25
    %s26 = sphi 0, %s23
    %s27 = sphi 0, %s26
    %s43 = sphi 0, %s27
    %s47 = sphi 0, %s47
    %s49 = sphi 0, %s47
    %s50 = sphi 0, %s49
    %s64 = sphi 0, %s50
    %s68 = sphi 0, %s68
    %s70 = sphi 0, %s68
    %s71 = sphi 0, %s70
    %s85 = sphi 0, %s71
    %s89 = sphi 0, %s89
    %s91 = sphi 0, %s89
    %s92 = sphi 0, %s91
    %s106 = sphi 0, %s92
    %s110 = sphi 0, %s110
    %s112 = sphi 0, %s110
    %s113 = sphi 0, %s112
    %s127 = sphi 0, %s113
    %s131 = sphi 0, %s131
    %s133 = sphi 0, %s131
    %s134 = sphi 0, %s133
    %s148 = sphi 0, %s134
    %s152 = sphi 0, %s152
    %s154 = sphi 0, %s152
    %s155 = sphi 0, %s154
    %s169 = sphi 0, %s155
    %s175 = sphi 0, %s177
    %s178 = sphi 0, %s175
    %s179 = sphi 0, %s178
    %s195 = sphi 0, %s179
  $region4: #{tpu_custom_call.1} parent=0 // loop_header_branch
    %16 = sbr.rel (%p14) target = $region8
  $region5: #{tpu_custom_call.1} parent=0 // loop_body
    %s18 = ssub.s32 %s13, 1
    %s19 = ssub.s32 %s13, 2
    %s20 = sadd.s32 %s13, 1
    %s21 = ssub.s32 %s13, %s20
    %p22 = scmp.eq.s32.totalorder %s21, 0
    %s24 = sadd.s32 %s23, 1
    %s25 = scalar_select %p22, %s23, %s24
    %p28 = pneg %p22
    %p29 = scmp.eq.s32.totalorder %s13, 1
    %p30 = por %p28, %p29
    %p31 = scmp.ne.s32.totalorder %s23, %s26
    %p32 = scmp.eq.s32.totalorder %s13, 0
    %p33 = por %p31, %p32
    %p34 = scmp.ne.s32.totalorder %s23, %s26
    %p35 = scmp.eq.s32.totalorder %s18, 1
    %p36 = por %p34, %p35
    %p37 = scmp.ne.s32.totalorder %s26, %s27
    %p38 = scmp.eq.s32.totalorder %s18, 0
    %p39 = por %p37, %p38
    %p40 = scmp.ne.s32.totalorder %s26, %s27
    %p41 = scmp.eq.s32.totalorder %s19, 1
    %p42 = por %p40, %p41
    %p44 = scmp.ne.s32.totalorder %s27, %s43
    %p45 = scmp.eq.s32.totalorder %s19, 0
    %p46 = por %p44, %p45
    %s48 = sadd.s32 %s47, 1
    %p51 = scmp.eq.s32.totalorder %s13, 1
    %p52 = scmp.ne.s32.totalorder %s47, %s49
    %p53 = scmp.eq.s32.totalorder %s13, 0
    %p54 = por %p52, %p53
    %p55 = scmp.ne.s32.totalorder %s47, %s49
    %p56 = scmp.eq.s32.totalorder %s18, 1
    %p57 = por %p55, %p56
    %p58 = scmp.ne.s32.totalorder %s49, %s50
    %p59 = scmp.eq.s32.totalorder %s18, 0
    %p60 = por %p58, %p59
    %p61 = scmp.ne.s32.totalorder %s49, %s50
    %p62 = scmp.eq.s32.totalorder %s19, 1
    %p63 = por %p61, %p62
    %p65 = scmp.ne.s32.totalorder %s50, %s64
    %p66 = scmp.eq.s32.totalorder %s19, 0
    %p67 = por %p65, %p66
    %s69 = sadd.s32 %s68, 1
    %p72 = scmp.eq.s32.totalorder %s13, 1
    %p73 = scmp.ne.s32.totalorder %s68, %s70
    %p74 = scmp.eq.s32.totalorder %s13, 0
    %p75 = por %p73, %p74
    %p76 = scmp.ne.s32.totalorder %s68, %s70
    %p77 = scmp.eq.s32.totalorder %s18, 1
    %p78 = por %p76, %p77
    %p79 = scmp.ne.s32.totalorder %s70, %s71
    %p80 = scmp.eq.s32.totalorder %s18, 0
    %p81 = por %p79, %p80
    %p82 = scmp.ne.s32.totalorder %s70, %s71
    %p83 = scmp.eq.s32.totalorder %s19, 1
    %p84 = por %p82, %p83
    %p86 = scmp.ne.s32.totalorder %s71, %s85
    %p87 = scmp.eq.s32.totalorder %s19, 0
    %p88 = por %p86, %p87
    %s90 = sadd.s32 %s89, 1
    %p93 = scmp.eq.s32.totalorder %s13, 1
    %p94 = scmp.ne.s32.totalorder %s89, %s91
    %p95 = scmp.eq.s32.totalorder %s13, 0
    %p96 = por %p94, %p95
    %p97 = scmp.ne.s32.totalorder %s89, %s91
    %p98 = scmp.eq.s32.totalorder %s18, 1
    %p99 = por %p97, %p98
    %p100 = scmp.ne.s32.totalorder %s91, %s92
    %p101 = scmp.eq.s32.totalorder %s18, 0
    %p102 = por %p100, %p101
    %p103 = scmp.ne.s32.totalorder %s91, %s92
    %p104 = scmp.eq.s32.totalorder %s19, 1
    %p105 = por %p103, %p104
    %p107 = scmp.ne.s32.totalorder %s92, %s106
    %p108 = scmp.eq.s32.totalorder %s19, 0
    %p109 = por %p107, %p108
    %s111 = sadd.s32 %s110, 1
    %p114 = scmp.eq.s32.totalorder %s13, 1
    %p115 = scmp.ne.s32.totalorder %s110, %s112
    %p116 = scmp.eq.s32.totalorder %s13, 0
    %p117 = por %p115, %p116
    %p118 = scmp.ne.s32.totalorder %s110, %s112
    %p119 = scmp.eq.s32.totalorder %s18, 1
    %p120 = por %p118, %p119
    %p121 = scmp.ne.s32.totalorder %s112, %s113
    %p122 = scmp.eq.s32.totalorder %s18, 0
    %p123 = por %p121, %p122
    %p124 = scmp.ne.s32.totalorder %s112, %s113
    %p125 = scmp.eq.s32.totalorder %s19, 1
    %p126 = por %p124, %p125
    %p128 = scmp.ne.s32.totalorder %s113, %s127
    %p129 = scmp.eq.s32.totalorder %s19, 0
    %p130 = por %p128, %p129
    %s132 = sadd.s32 %s131, 1
    %p135 = scmp.eq.s32.totalorder %s13, 1
    %p136 = scmp.ne.s32.totalorder %s131, %s133
    %p137 = scmp.eq.s32.totalorder %s13, 0
    %p138 = por %p136, %p137
    %p139 = scmp.ne.s32.totalorder %s131, %s133
    %p140 = scmp.eq.s32.totalorder %s18, 1
    %p141 = por %p139, %p140
    %p142 = scmp.ne.s32.totalorder %s133, %s134
    %p143 = scmp.eq.s32.totalorder %s18, 0
    %p144 = por %p142, %p143
    %p145 = scmp.ne.s32.totalorder %s133, %s134
    %p146 = scmp.eq.s32.totalorder %s19, 1
    %p147 = por %p145, %p146
    %p149 = scmp.ne.s32.totalorder %s134, %s148
    %p150 = scmp.eq.s32.totalorder %s19, 0
    %p151 = por %p149, %p150
    %s153 = sadd.s32 %s152, 1
    %p156 = scmp.eq.s32.totalorder %s13, 1
    %p157 = scmp.ne.s32.totalorder %s152, %s154
    %p158 = scmp.eq.s32.totalorder %s13, 0
    %p159 = por %p157, %p158
    %p160 = scmp.ne.s32.totalorder %s152, %s154
    %p161 = scmp.eq.s32.totalorder %s18, 1
    %p162 = por %p160, %p161
    %p163 = scmp.ne.s32.totalorder %s154, %s155
    %p164 = scmp.eq.s32.totalorder %s18, 0
    %p165 = por %p163, %p164
    %p166 = scmp.ne.s32.totalorder %s154, %s155
    %p167 = scmp.eq.s32.totalorder %s19, 1
    %p168 = por %p166, %p167
    %p170 = scmp.ne.s32.totalorder %s155, %s169
    %p171 = scmp.eq.s32.totalorder %s19, 0
    %p172 = por %p170, %p171
    %s173 = ssub.s32 %s13, %s20
    %p174 = scmp.eq.s32.totalorder %s173, 0
    %s176 = sadd.s32 %s175, 1
    %s177 = scalar_select %p174, %s175, %s176
    %p180 = pneg %p174
    %p181 = scmp.eq.s32.totalorder %s13, 1
    %p182 = por %p180, %p181
    %p183 = scmp.ne.s32.totalorder %s175, %s178
    %p184 = scmp.eq.s32.totalorder %s13, 0
    %p185 = por %p183, %p184
    %p186 = scmp.ne.s32.totalorder %s175, %s178
    %p187 = scmp.eq.s32.totalorder %s18, 1
    %p188 = por %p186, %p187
    %p189 = scmp.ne.s32.totalorder %s178, %s179
    %p190 = scmp.eq.s32.totalorder %s18, 0
    %p191 = por %p189, %p190
    %p192 = scmp.ne.s32.totalorder %s178, %s179
    %p193 = scmp.eq.s32.totalorder %s19, 1
    %p194 = por %p192, %p193
    %p196 = scmp.ne.s32.totalorder %s179, %s195
    %p197 = scmp.eq.s32.totalorder %s19, 0
    %p198 = por %p196, %p197
    %p199 = scmp.le.s32.totalorder 1, %s13
    %p200 = scmp.lt.s32.totalorder %s13, 3
    %p201 = pnand %p199, %p200
    %p202 = pneg %p201
    // Predicated region
    $region9: #{tpu_custom_call.1} parent=5 // pred_check
      _
    $region10: #{tpu_custom_call.1} parent=5 // pred_check_branch
      %204 = sbr.rel (%p201) target = $region12
    $region11: #{tpu_custom_call.1} parent=5 // pred_region
      %s205 = ssub.s32 %s13, 1
      // Predicated region
      $region13: #{tpu_custom_call.1} parent=11 // pred_check
        %p206 = pneg %p60
      $region14: #{tpu_custom_call.1} parent=11 // pred_check_branch
        %208 = sbr.rel (%p206) target = $region16
      $region15: #{tpu_custom_call.1} parent=11 // pred_region
        _
      $region16: #{tpu_custom_call.1} parent=11 // pred_fallthru
        _
      // Predicated region
      $region17: #{tpu_custom_call.1} parent=11 // pred_check
        %p209 = pneg %p81
      $region18: #{tpu_custom_call.1} parent=11 // pred_check_branch
        %211 = sbr.rel (%p209) target = $region20
      $region19: #{tpu_custom_call.1} parent=11 // pred_region
        _
      $region20: #{tpu_custom_call.1} parent=11 // pred_fallthru
        _
      // Predicated region
      $region21: #{tpu_custom_call.1} parent=11 // pred_check
        %p212 = pneg %p102
      $region22: #{tpu_custom_call.1} parent=11 // pred_check_branch
        %214 = sbr.rel (%p212) target = $region24
      $region23: #{tpu_custom_call.1} parent=11 // pred_region
        _
      $region24: #{tpu_custom_call.1} parent=11 // pred_fallthru
        _
      // Predicated region
      $region25: #{tpu_custom_call.1} parent=11 // pred_check
        %p215 = pneg %p123
      $region26: #{tpu_custom_call.1} parent=11 // pred_check_branch
        %217 = sbr.rel (%p215) target = $region28
      $region27: #{tpu_custom_call.1} parent=11 // pred_region
        _
      $region28: #{tpu_custom_call.1} parent=11 // pred_fallthru
        _
      // Predicated region
      $region29: #{tpu_custom_call.1} parent=11 // pred_check
        %p218 = pneg %p144
      $region30: #{tpu_custom_call.1} parent=11 // pred_check_branch
        %220 = sbr.rel (%p218) target = $region32
      $region31: #{tpu_custom_call.1} parent=11 // pred_region
        _
      $region32: #{tpu_custom_call.1} parent=11 // pred_fallthru
        _
      // Predicated region
      $region33: #{tpu_custom_call.1} parent=11 // pred_check
        %p221 = pneg %p165
      $region34: #{tpu_custom_call.1} parent=11 // pred_check_branch
        %223 = sbr.rel (%p221) target = $region36
      $region35: #{tpu_custom_call.1} parent=11 // pred_region
        _
      $region36: #{tpu_custom_call.1} parent=11 // pred_fallthru
        _
    $region12: #{tpu_custom_call.1} parent=5 // pred_fallthru
      _
    %p224 = scmp.lt.s32.totalorder %s13, 2
    // Predicated region
    $region37: #{tpu_custom_call.1} parent=5 // pred_check
      %p225 = pneg %p224
    $region38: #{tpu_custom_call.1} parent=5 // pred_check_branch
      %227 = sbr.rel (%p225) target = $region40
    $region39: #{tpu_custom_call.1} parent=5 // pred_region
      // Predicated region
      $region41: #{tpu_custom_call.1} parent=39 // pred_check
        %p228 = pneg %p33
      $region42: #{tpu_custom_call.1} parent=39 // pred_check_branch
        %230 = sbr.rel (%p228) target = $region44
      $region43: #{tpu_custom_call.1} parent=39 // pred_region
        %s231 = smul.u32 4, %s13
        %p232 = scmp.lt.s32.totalorder %s231, 7
        %s233 = scalar_select %p232, %s231, 7
        %s234 = smul.addr %s233, 8
        %s235 = scalar_lea.vmem %s0, %s234
        %s236 = smul.u32 4, %s13
      $region44: #{tpu_custom_call.1} parent=39 // pred_fallthru
        _
    $region40: #{tpu_custom_call.1} parent=5 // pred_fallthru
      _
    %p237 = scmp.le.s32.totalorder 1, %s13
    %p238 = scmp.lt.s32.totalorder %s13, 3
    %p239 = pnand %p237, %p238
    %p240 = pneg %p239
    // Predicated region
    $region45: #{tpu_custom_call.1} parent=5 // pred_check
      _
    $region46: #{tpu_custom_call.1} parent=5 // pred_check_branch
      %242 = sbr.rel (%p239) target = $region48
    $region47: #{tpu_custom_call.1} parent=5 // pred_region
      %s243 = ssub.s32 %s13, 1
      %s244 = smul.u32 4, %s18
      %p245 = scmp.lt.s32.totalorder %s244, 7
      %s246 = scalar_select %p245, %s244, 7
      %s247 = smul.addr %s246, 8
      %s248 = scalar_lea.vmem %s0, %s247
      %p249 = pneg %p39
      %p250 = pneg %p36
      %p251 = pneg %p60
      %p252 = pneg %p57
      %p253 = pneg %p81
      %p254 = pneg %p78
      %p255 = pneg %p102
      %p256 = pneg %p99
      %p257 = pneg %p123
      %p258 = pneg %p120
      %p259 = pneg %p144
      %p260 = pneg %p141
      %p261 = pneg %p165
      %p262 = pneg %p162
      %p263 = pneg %p191
      %p264 = pneg %p188
      %s265 = smul.u32 4, %s18
      %p266 = scmp.lt.s32.totalorder %s265, 7
      %s267 = scalar_select %p266, %s265, 7
      %s268 = smul.addr %s267, 8
      %s269 = scalar_lea.vmem %s7, %s268
      %s270 = smul.u32 4, %s18
      %p271 = scmp.lt.s32.totalorder %s270, 7
      %s272 = scalar_select %p271, %s270, 7
      %s273 = smul.addr %s272, 8
      %s274 = scalar_lea.vmem %s0, %s273
      %s275 = smul.u32 4, %s18
      %s276 = smul.u32 4, %s18
      %p277 = scmp.lt.s32.totalorder %s276, 7
      %s278 = scalar_select %p277, %s276, 7
      %s279 = smul.addr %s278, 8
      %s280 = scalar_lea.vmem %s7, %s279
      %s281 = smul.u32 4, %s18
      %v282 = vld [vmem:[%s274] sm:$0xff]
      %v283 = vld [vmem:[%s274 + $0x8] sm:$0xff]
      %v284 = vld [vmem:[%s274 + $0x10] sm:$0xff]
      %v285 = vld [vmem:[%s274 + $0x18] sm:$0xff]
      %v286 = vld [vmem:[%s1] sm:$0xff]
      %v287 = vld [vmem:[%s2] sm:$0x1]
      %v289 = vperm.slane %v287, 0
      %vm291 = vcmask 64512
      %v293 = vsel %vm291, %v282, 0
      %v296 = vsel %vm291, %v283, 0
      %v299 = vsel %vm291, %v284, 0
      %v302 = vsel %vm291, %v285, 0
      %304 = vmatpush.msra.mxu0 0.0
      %305 = vmatpush.msra.mxu0 0.0
      %306 = vmatpush.msra.mxu0 0.0
      %307 = vmatpush.msra.mxu0 0.0
      %308 = vmatpush.msra.mxu0 0.0
      %309 = vmatpush.msra.mxu0 0.0
      %310 = vmatpush.msra.mxu0 0.0
      %311 = vmatpush.msra.mxu0 0.0
      %312 = vmatpush.msra.mxu0 0.0
      %313 = vmatpush.msra.mxu0 0.0
      %314 = vmatpush.msra.mxu0 0.0
      %315 = vmatpush.msra.mxu0 0.0
      %316 = vmatpush.msra.mxu0 0.0
      %317 = vmatpush.msra.mxu0 0.0
      %318 = vmatpush.msra.mxu0 0.0
      %319 = vmatpush.msra.mxu0 %v286
      %320 = vmatmul.f32.gmra.mxu0 %v293
      %v321 = vpop.f32.mrf.mxu0
      %v322 = vadd.f32 %v289, %v321
      %323 = vmatmul.f32.gmra.mxu0 %v296
      %v324 = vpop.f32.mrf.mxu0
      %v325 = vadd.f32 %v289, %v324
      %326 = vmatmul.f32.gmra.mxu0 %v299
      %v327 = vpop.f32.mrf.mxu0
      %v328 = vadd.f32 %v289, %v327
      %329 = vmatmul.f32.gmra.mxu0 %v302
      %v330 = vpop.f32.mrf.mxu0
      %v331 = vadd.f32 %v289, %v330
      %332 = vdwg.mxu0
      %v333 = vmax.f32 %v322, 0.0
      %v334 = vmax.f32 %v325, 0.0
      %v335 = vmax.f32 %v328, 0.0
      %v336 = vmax.f32 %v331, 0.0
      %v337 = vld [vmem:[%s3] sm:$0xff]
      %v338 = vld [vmem:[%s3 + $0x8] sm:$0xff]
      %v339 = vld [vmem:[%s3 + $0x10] sm:$0xff]
      %v340 = vld [vmem:[%s3 + $0x18] sm:$0xff]
      %v341 = vld [vmem:[%s3 + $0x20] sm:$0xff]
      %v342 = vld [vmem:[%s3 + $0x28] sm:$0xff]
      %v343 = vld [vmem:[%s3 + $0x30] sm:$0xff]
      %v344 = vld [vmem:[%s3 + $0x38] sm:$0xff]
      %v345 = vld [vmem:[%s3 + $0x40] sm:$0xff]
      %v346 = vld [vmem:[%s3 + $0x48] sm:$0xff]
      %v347 = vld [vmem:[%s3 + $0x50] sm:$0xff]
      %v348 = vld [vmem:[%s3 + $0x58] sm:$0xff]
      %v349 = vld [vmem:[%s3 + $0x60] sm:$0xff]
      %v350 = vld [vmem:[%s3 + $0x68] sm:$0xff]
      %v351 = vld [vmem:[%s3 + $0x70] sm:$0xff]
      %v352 = vld [vmem:[%s3 + $0x78] sm:$0xff]
      %v353 = vld [vmem:[%s4] sm:$0x1]
      %v355 = vperm.slane %v353, 0
      %357 = vmatpush.msra.mxu0 %v352
      %358 = vmatpush.msra.mxu0 %v351
      %359 = vmatpush.msra.mxu0 %v350
      %360 = vmatpush.msra.mxu0 %v349
      %361 = vmatpush.msra.mxu0 %v348
      %362 = vmatpush.msra.mxu0 %v347
      %363 = vmatpush.msra.mxu0 %v346
      %364 = vmatpush.msra.mxu0 %v345
      %365 = vmatpush.msra.mxu0 %v344
      %366 = vmatpush.msra.mxu0 %v343
      %367 = vmatpush.msra.mxu0 %v342
      %368 = vmatpush.msra.mxu0 %v341
      %369 = vmatpush.msra.mxu0 %v340
      %370 = vmatpush.msra.mxu0 %v339
      %371 = vmatpush.msra.mxu0 %v338
      %372 = vmatpush.msra.mxu0 %v337
      %373 = vmatmul.f32.gmra.mxu0 %v333
      %v374 = vpop.f32.mrf.mxu0
      %v375 = vadd.f32 %v355, %v374
      %376 = vmatmul.f32.gmra.mxu0 %v334
      %v377 = vpop.f32.mrf.mxu0
      %v378 = vadd.f32 %v355, %v377
      %379 = vmatmul.f32.gmra.mxu0 %v335
      %v380 = vpop.f32.mrf.mxu0
      %v381 = vadd.f32 %v355, %v380
      %382 = vmatmul.f32.gmra.mxu0 %v336
      %v383 = vpop.f32.mrf.mxu0
      %v384 = vadd.f32 %v355, %v383
      %385 = vdwg.mxu0
      %v386 = vmax.f32 %v375, 0.0
      %v387 = vmax.f32 %v378, 0.0
      %v388 = vmax.f32 %v381, 0.0
      %v389 = vmax.f32 %v384, 0.0
      %v390 = vld [vmem:[%s5] sm:$0xff]
      %v391 = vld [vmem:[%s5 + $0x8] sm:$0xff]
      %v392 = vld [vmem:[%s5 + $0x10] sm:$0xff]
      %v393 = vld [vmem:[%s5 + $0x18] sm:$0xff]
      %v394 = vld [vmem:[%s5 + $0x20] sm:$0xff]
      %v395 = vld [vmem:[%s5 + $0x28] sm:$0xff]
      %v396 = vld [vmem:[%s5 + $0x30] sm:$0xff]
      %v397 = vld [vmem:[%s5 + $0x38] sm:$0xff]
      %v398 = vld [vmem:[%s5 + $0x40] sm:$0xff]
      %v399 = vld [vmem:[%s5 + $0x48] sm:$0xff]
      %v400 = vld [vmem:[%s5 + $0x50] sm:$0xff]
      %v401 = vld [vmem:[%s5 + $0x58] sm:$0xff]
      %v402 = vld [vmem:[%s5 + $0x60] sm:$0xff]
      %v403 = vld [vmem:[%s5 + $0x68] sm:$0xff]
      %v404 = vld [vmem:[%s5 + $0x70] sm:$0xff]
      %v405 = vld [vmem:[%s5 + $0x78] sm:$0xff]
      %v406 = vld [vmem:[%s6] sm:$0x1]
      %v408 = vperm.slane %v406, 0
      %410 = vmatpush.msra.mxu0 %v405
      %411 = vmatpush.msra.mxu0 %v404
      %412 = vmatpush.msra.mxu0 %v403
      %413 = vmatpush.msra.mxu0 %v402
      %414 = vmatpush.msra.mxu0 %v401
      %415 = vmatpush.msra.mxu0 %v400
      %416 = vmatpush.msra.mxu0 %v399
      %417 = vmatpush.msra.mxu0 %v398
      %418 = vmatpush.msra.mxu0 %v397
      %419 = vmatpush.msra.mxu0 %v396
      %420 = vmatpush.msra.mxu0 %v395
      %421 = vmatpush.msra.mxu0 %v394
      %422 = vmatpush.msra.mxu0 %v393
      %423 = vmatpush.msra.mxu0 %v392
      %424 = vmatpush.msra.mxu0 %v391
      %425 = vmatpush.msra.mxu0 %v390
      %426 = vmatmul.f32.gmra.mxu0 %v386
      %v427 = vpop.f32.mrf.mxu0
      %v428 = vadd.f32 %v408, %v427
      %429 = vmatmul.f32.gmra.mxu0 %v387
      %v430 = vpop.f32.mrf.mxu0
      %v431 = vadd.f32 %v408, %v430
      %432 = vmatmul.f32.gmra.mxu0 %v388
      %v433 = vpop.f32.mrf.mxu0
      %v434 = vadd.f32 %v408, %v433
      %435 = vmatmul.f32.gmra.mxu0 %v389
      %v436 = vpop.f32.mrf.mxu0
      %v437 = vadd.f32 %v408, %v436
      %438 = vdwg.mxu0
      %v439 = vsub.f32 0.0, %v428
      %v440 = vsub.f32 0.0, %v431
      %v441 = vsub.f32 0.0, %v434
      %v442 = vsub.f32 0.0, %v437
      %v443 = vmul.f32 %v439, 1.442695
      %v444 = vpow.pop %v443
      %v445 = vmul.f32 %v440, 1.442695
      %v446 = vpow.pop %v445
      %v447 = vmul.f32 %v441, 1.442695
      %v448 = vpow.pop %v447
      %v449 = vmul.f32 %v442, 1.442695
      %v450 = vpow.pop %v449
      %v451 = vadd.f32 %v444, 1.0
      %v452 = vadd.f32 %v446, 1.0
      %v453 = vadd.f32 %v448, 1.0
      %v454 = vadd.f32 %v450, 1.0
      %v455 = vrcp.pop %v451
      %v456 = vrcp.pop %v452
      %v457 = vrcp.pop %v453
      %v458 = vrcp.pop %v454
      %459 = vst.msk [vmem:[%s280] sm:$0xff] %vm291, %v455
      %460 = vst.msk [vmem:[%s280 + $0x8] sm:$0xff] %vm291, %v456
      %461 = vst.msk [vmem:[%s280 + $0x10] sm:$0xff] %vm291, %v457
      %462 = vst.msk [vmem:[%s280 + $0x18] sm:$0xff] %vm291, %v458
      %s463 = smul.u32 4, %s18
      %p464 = scmp.lt.s32.totalorder %s463, 7
      %s465 = scalar_select %p464, %s463, 7
      %s466 = smul.addr %s465, 8
      %s467 = scalar_lea.vmem %s7, %s466
      // Predicated region
      $region49: #{tpu_custom_call.1} parent=47 // pred_check
        %p468 = pneg %p188
      $region50: #{tpu_custom_call.1} parent=47 // pred_check_branch
        %470 = sbr.rel (%p468) target = $region52
      $region51: #{tpu_custom_call.1} parent=47 // pred_region
        %s471 = smul.u32 4, %s18
      $region52: #{tpu_custom_call.1} parent=47 // pred_fallthru
        _
    $region48: #{tpu_custom_call.1} parent=5 // pred_fallthru
      _
    %p472 = scmp.le.s32.totalorder 2, %s13
    // Predicated region
    $region53: #{tpu_custom_call.1} parent=5 // pred_check
      %p473 = pneg %p472
    $region54: #{tpu_custom_call.1} parent=5 // pred_check_branch
      %475 = sbr.rel (%p473) target = $region56
    $region55: #{tpu_custom_call.1} parent=5 // pred_region
      %s476 = ssub.s32 %s13, 2
      // Predicated region
      $region57: #{tpu_custom_call.1} parent=55 // pred_check
        %p477 = pneg %p194
      $region58: #{tpu_custom_call.1} parent=55 // pred_check_branch
        %479 = sbr.rel (%p477) target = $region60
      $region59: #{tpu_custom_call.1} parent=55 // pred_region
        %s480 = smul.u32 4, %s19
        %p481 = scmp.lt.s32.totalorder %s480, 7
        %s482 = scalar_select %p481, %s480, 7
        %s483 = smul.addr %s482, 8
        %s484 = scalar_lea.vmem %s7, %s483
      $region60: #{tpu_custom_call.1} parent=55 // pred_fallthru
        _
    $region56: #{tpu_custom_call.1} parent=5 // pred_fallthru
      _
  $region6: #{tpu_custom_call.1} parent=0 // loop_footer
    %s17 = sadd.s32 1, %s13
  $region7: #{tpu_custom_call.1} parent=0 // loop_footer_branch
    %12 = sbr.rel target = $region3
  $region8: #{tpu_custom_call.1} parent=0 // loop_exit
    _

</llo_original>
